<compile_context>
chip_gen: v7x
topology: tpu7x:2x2x1
jax: 0.10.0
libtpu: 0.0.40
codegen_flags: <defaults>
</compile_context>

<pallas_src>
import math
from functools import partial

import jax
import jax.numpy as jnp
from jax import lax
from jax.experimental import pallas as pl
from jax.experimental.pallas import tpu as pltpu


def _round_up(x, m):
    return ((x + m - 1) // m) * m


def _pick_tile(dim_pad, target, gran):
    """Largest multiple of `gran` that divides `dim_pad` and is <= target."""
    cap = min(target, dim_pad)
    best = gran
    t = gran
    while t <= cap:
        if dim_pad % t == 0:
            best = t
        t += gran
    return best


def _choose_m_tiling(batch, target):
    """Pad batch only to a multiple of 8; pick an M tile that divides it.

    Prefers a tile giving >=2 grid steps (so v7x's two TensorCores both get work).
    Worst case (8*prime batch) falls back to an 8-row tile; collocation batches are
    normally nicely divisible so this stays a no-op in practice.
    """
    m_pad = _round_up(max(batch, 1), 8)
    cap = min(target, m_pad)
    divs = [t for t in range(8, cap + 1, 8) if m_pad % t == 0]
    multi = [t for t in divs if m_pad // t >= 2]
    tm = max(multi) if multi else max(divs)
    return tm, m_pad


# --------------------------- kernels ---------------------------

def _linear_resident_kernel(x_ref, w_ref, b_ref, o_ref, *, precision, activation):
    # x_ref: (tm, K) streams over the batch; w_ref: (K, N) pinned (constant block
    # index -> no re-DMA across grid steps); b_ref: (1, N); o_ref: (tm, N).
    acc = jnp.dot(x_ref[...], w_ref[...],
                  preferred_element_type=jnp.float32, precision=precision)
    acc = acc + b_ref[...].astype(jnp.float32)
    if activation is not None:
        acc = activation(acc)
    o_ref[...] = acc.astype(o_ref.dtype)


def _linear_tiled_kernel(x_ref, w_ref, b_ref, o_ref, acc_ref, *, precision, activation):
    # x_ref: (tm, tk), w_ref: (tk, tn), b_ref: (1, tn), o_ref: (tm, tn).
    k = pl.program_id(2)

    @pl.when(k == 0)
    def _():
        acc_ref[...] = jnp.zeros_like(acc_ref)

    acc_ref[...] += jnp.dot(x_ref[...], w_ref[...],
                            preferred_element_type=jnp.float32, precision=precision)

    @pl.when(k == pl.num_programs(2) - 1)
    def _():
        out = acc_ref[...] + b_ref[...].astype(jnp.float32)
        if activation is not None:
            out = activation(out)
        o_ref[...] = out.astype(o_ref.dtype)


# --------------------------- host-side wrappers ---------------------------

def prepare_linear_params(weight, bias, *,
                          resident_weight_bytes_limit=8 * 1024 * 1024,
                          force_tiled=False,
                          tm=512, tn=512, tk=512,
                          precision=lax.Precision.HIGHEST,
                          activation=None):
    """One-time per-layer prep (hoisted out of the per-call path).

    weight: (OUT, IN) PyTorch nn.Linear layout; bias: (OUT,).
    Transposes the weight once to (IN, OUT) = (K, N) and, for the tiled fallback,
    pads weight/bias to 128-lane granularity here instead of every forward call.
    """
    OUT, IN = weight.shape
    wT = jnp.asarray(weight).T              # (K, N) canonical matmul layout
    b2 = jnp.asarray(bias).reshape(1, OUT)

    w_bytes = IN * OUT * wT.dtype.itemsize
    resident = (not force_tiled) and (w_bytes <= resident_weight_bytes_limit)

    if resident:
        return dict(kind="resident", wT=wT, b2=b2,
                    in_features=IN, out_features=OUT, tm=tm,
                    precision=precision, activation=activation)

    # Weight too large to pin -> classic 3-D tiled matmul with f32 accumulator.
    K_pad = _round_up(IN, 128)
    N_pad = _round_up(OUT, 128)
    tk_eff = _pick_tile(K_pad, tk, 128)
    tn_eff = _pick_tile(N_pad, tn, 128)
    wT_p = wT if (K_pad == IN and N_pad == OUT) else jnp.pad(
        wT, ((0, K_pad - IN), (0, N_pad - OUT)))
    b2_p = b2 if N_pad == OUT else jnp.pad(b2, ((0, 0), (0, N_pad - OUT)))
    return dict(kind="tiled", wT=wT_p, b2=b2_p,
                in_features=IN, out_features=OUT,
                K_pad=K_pad, N_pad=N_pad, tm=tm, tn=tn_eff, tk=tk_eff,
                precision=precision, activation=activation)


def pallas_linear(x, params):
    """y = x @ weight.T + bias using prepared params (see prepare_linear_params)."""
    B, IN = x.shape
    assert IN == params["in_features"], (IN, params["in_features"])
    OUT = params["out_features"]
    precision = params["precision"]
    activation = params["activation"]

    if params["kind"] == "resident":
        wT, b2 = params["wT"], params["b2"]
        tm_eff, M_pad = _choose_m_tiling(B, params["tm"])
        x_p = x if M_pad == B else jnp.pad(x, ((0, M_pad - B), (0, 0)))

        out = pl.pallas_call(
            partial(_linear_resident_kernel, precision=precision, activation=activation),
            out_shape=jax.ShapeDtypeStruct((M_pad, OUT), x.dtype),
            grid_spec=pltpu.PrefetchScalarGridSpec(
                num_scalar_prefetch=0,
                grid=(M_pad // tm_eff,),
                in_specs=[
                    pl.BlockSpec((tm_eff, IN), lambda i: (i, 0)),   # x streams over M
                    pl.BlockSpec((IN, OUT), lambda i: (0, 0)),      # weight pinned in VMEM
                    pl.BlockSpec((1, OUT), lambda i: (0, 0)),       # bias pinned in VMEM
                ],
                out_specs=pl.BlockSpec((tm_eff, OUT), lambda i: (i, 0)),
            ),
            compiler_params=pltpu.CompilerParams(
                dimension_semantics=("parallel",),        # megacore / 2-TC sharding
                vmem_limit_bytes=48 * 1024 * 1024,        # fits v5e/v6e and v7x's 64 MiB
            ),
        )(x_p, wT, b2)
        return out if M_pad == B else out[:B]

    # ----- tiled fallback (large weights) -----
    wT, b2 = params["wT"], params["b2"]
    K_pad, N_pad = params["K_pad"], params["N_pad"]
    tn_eff, tk_eff = params["tn"], params["tk"]
    tm_eff, M_pad = _choose_m_tiling(B, params["tm"])

    x_p = x
    if M_pad != B or K_pad != IN:
        x_p = jnp.pad(x, ((0, M_pad - B), (0, K_pad - IN)))

    grid = (M_pad // tm_eff, N_pad // tn_eff, K_pad // tk_eff)
    out = pl.pallas_call(
        partial(_linear_tiled_kernel, precision=precision, activation=activation),
        out_shape=jax.ShapeDtypeStruct((M_pad, N_pad), x.dtype),
        grid_spec=pltpu.PrefetchScalarGridSpec(
            num_scalar_prefetch=0,
            grid=grid,
            in_specs=[
                pl.BlockSpec((tm_eff, tk_eff), lambda i, j, k: (i, k)),   # x
                pl.BlockSpec((tk_eff, tn_eff), lambda i, j, k: (k, j)),   # weight (K, N)
                pl.BlockSpec((1, tn_eff), lambda i, j, k: (0, j)),        # bias
            ],
            out_specs=pl.BlockSpec((tm_eff, tn_eff), lambda i, j, k: (i, j)),
            scratch_shapes=[pltpu.VMEM((tm_eff, tn_eff), jnp.float32)],
        ),
        compiler_params=pltpu.CompilerParams(
            dimension_semantics=("parallel", "parallel", "arbitrary"),
            vmem_limit_bytes=48 * 1024 * 1024,
        ),
    )(x_p, wT, b2)

    if M_pad != B or N_pad != OUT:
        out = out[:B, :OUT]
    return out


def init_layer_params(key, in_features, out_features, tanh_activation=True):
    """xavier_normal_ (gain = 5/3 for tanh) weight, zero bias — matches the module."""
    gain = 5.0 / 3.0 if tanh_activation else 1.0
    std = gain * math.sqrt(2.0 / (in_features + out_features))
    weight = std * jax.random.normal(key, (out_features, in_features), dtype=jnp.float32)
    bias = jnp.zeros((out_features,), dtype=jnp.float32)
    return weight, bias


if __name__ == "__main__":
    key = jax.random.PRNGKey(0)
    k_x, k_w = jax.random.split(key)

    batch, in_features, out_features = 16, 32, 64
    x = jax.random.normal(k_x, (batch, in_features), dtype=jnp.float32)
    weight, bias = init_layer_params(k_w, in_features, out_features, tanh_activation=True)

    y_ref = x @ weight.T + bias

    # Main path: weight pinned in VMEM, 1-D grid over the batch axis.
    params = prepare_linear_params(weight, bias)
    y = pallas_linear(x, params)
    jax.block_until_ready(y)
    assert y.shape == (batch, out_features)
    assert jnp.allclose(y, y_ref, atol=1e-5, rtol=1e-5)

    # Fallback path (weight too large to pin) — exercised here for coverage.
    params_tiled = prepare_linear_params(weight, bias, force_tiled=True)
    y_t = pallas_linear(x, params_tiled)
    jax.block_until_ready(y_t)
    assert jnp.allclose(y_t, y_ref, atol=1e-5, rtol=1e-5)

    print("KERNEL_OK")
</pallas_src>

<mosaic_0001>
module attributes {stable_mosaic.version = 11 : i64} {
  func.func @_linear_resident_kernel(%arg0: i32, %arg1: memref<8x32xf32, #tpu.memory_space<vmem>>, %arg2: memref<32x64xf32, #tpu.memory_space<vmem>>, %arg3: memref<1x64xf32, #tpu.memory_space<vmem>>, %arg4: memref<8x64xf32, #tpu.memory_space<vmem>>) attributes {dimension_semantics = [#tpu.dimension_semantics<parallel>], iteration_bounds = array<i64: 2>, scalar_prefetch = 0 : i64, scratch_operands = 0 : i64, tpu.core_type = #tpu.core_type<tc>, window_params = [{transform_indices = @transform_0, window_bounds = array<i64: 8, 32>}, {pipeline_mode = #tpu.pipeline_mode<synchronous>, transform_indices = @transform_1, window_bounds = array<i64: 32, 64>}, {pipeline_mode = #tpu.pipeline_mode<synchronous>, transform_indices = @transform_2, window_bounds = array<i64: 1, 64>}, {transform_indices = @transform_3, window_bounds = array<i64: 8, 64>}]} {
    %c0 = arith.constant 0 : index
    %c0_0 = arith.constant 0 : index
    %0 = vector.load %arg1[%c0, %c0_0] : memref<8x32xf32, #tpu.memory_space<vmem>>, vector<8x32xf32>
    %c0_1 = arith.constant 0 : index
    %c0_2 = arith.constant 0 : index
    %1 = vector.load %arg2[%c0_1, %c0_2] : memref<32x64xf32, #tpu.memory_space<vmem>>, vector<32x64xf32>
    %cst = arith.constant dense<0.000000e+00> : vector<8x64xf32>
    %2 = tpu.matmul %0, %1, %cst {dimension_numbers = #tpu.dot_dimension_numbers<[1], [0], [0], [1], [0, 0, 1, 1], [], []>, precision = #tpu.contract_precision<fp32>} : vector<8x32xf32>, vector<32x64xf32>, vector<8x64xf32> -> vector<8x64xf32>
    %c0_3 = arith.constant 0 : index
    %c0_4 = arith.constant 0 : index
    %3 = vector.load %arg3[%c0_3, %c0_4] : memref<1x64xf32, #tpu.memory_space<vmem>>, vector<1x64xf32>
    %4 = vector.broadcast %3 : vector<1x64xf32> to vector<8x64xf32>
    %5 = arith.addf %2, %4 : vector<8x64xf32>
    %c0_5 = arith.constant 0 : index
    %c0_6 = arith.constant 0 : index
    %6 = vector.load %arg4[%c0_5, %c0_6] : memref<8x64xf32, #tpu.memory_space<vmem>>, vector<8x64xf32>
    tpu.vector_store %arg4[%c0_5, %c0_6], %5 {strides = array<i32>} : memref<8x64xf32, #tpu.memory_space<vmem>>, vector<8x64xf32>,
    return
  }
  func.func @transform_0(%arg0: i32) -> (i32, i32) {
    %c0_i32 = arith.constant 0 : i32
    %c0_i32_0 = arith.constant 0 : i32
    return %arg0, %c0_i32 : i32, i32
  }
  func.func @transform_1(%arg0: i32) -> (i32, i32) {
    %c0_i32 = arith.constant 0 : i32
    %c0_i32_0 = arith.constant 0 : i32
    %c0_i32_1 = arith.constant 0 : i32
    return %c0_i32, %c0_i32_0 : i32, i32
  }
  func.func @transform_2(%arg0: i32) -> (i32, i32) {
    %c0_i32 = arith.constant 0 : i32
    %c0_i32_0 = arith.constant 0 : i32
    %c0_i32_1 = arith.constant 0 : i32
    return %c0_i32, %c0_i32_0 : i32, i32
  }
  func.func @transform_3(%arg0: i32) -> (i32, i32) {
    %c0_i32 = arith.constant 0 : i32
    %c0_i32_0 = arith.constant 0 : i32
    return %arg0, %c0_i32 : i32, i32
  }
}

</mosaic_0001>

<llo_original>
// kernel: tpu_custom_call.1
$region0: #{tpu_custom_call.1}
  #allocation0 [shape = 'u32[]', space=smem, size = 0x4, offset = 0x4, fixed_abs, tag = 'smem constant byte address 0x4 - core index']
  #allocation1 [shape = 'u32[144,128]{1,0:T(1,128)}', space=vmem, size = 0x12000, scoped, tag = 'internal scratch']
  %s0 = inlined_call_operand.hbm [shape: f32[16,32], index: 0, kind: input, shape index: {}]
  %s1 = inlined_call_operand.hbm [shape: f32[32,64], index: 1, kind: input, shape index: {}]
  %s2 = inlined_call_operand.vmem [shape: f32[1,64], index: 2, kind: input, shape index: {}]
  %s3 = inlined_call_operand.hbm [shape: f32[16,64], index: 3, kind: output, shape index: {}]
  %s4 = sld [smem:[#allocation0]]
  $region53: #{tpu_custom_call.1} parent=0
    _
  %s6 = ssub.s32 1, %s4
  %s7 = scalar_select 0, %s6, %s4
  $region1: #{tpu_custom_call.1} parent=0
    #allocation2 [shape = 'u8[8192]{0}', space=vmem, size = 0x2000, scoped, tag = 'input window, operand 0']
    #allocation3 [shape = 's32[2]{0}', space=sflag, size = 0x8, scoped, tag = 'scoped memory for tpu_custom_call.1']
    #allocation4 [shape = 's32[2]{0}', space=sflag, size = 0x8, scoped, tag = 'scoped memory for tpu_custom_call.1']
    #allocation5 [shape = 'u8[16384]{0}', space=vmem, size = 0x4000, scoped, tag = 'input window, operand 1, single buffered']
    #allocation6 [shape = 's32[1]{0}', space=sflag, size = 0x4, scoped, tag = 'scoped memory for tpu_custom_call.1']
    #allocation7 [shape = 'u8[8192]{0}', space=vmem, size = 0x2000, scoped, tag = 'output window, operand 0']
    %8 = vsyncpa [#allocation3], 0
    %s9 = scalar_lea.sflag [#allocation3], 1
    %10 = vsyncpa %s9, 0
    %11 = vsyncpa [#allocation6], 0
    %12 = vsyncpa [#allocation4], 0
    %s13 = scalar_lea.sflag [#allocation4], 1
    %14 = vsyncpa %s13, 0
    loop: start=0, step=1, limit=4
    $region2: #{tpu_custom_call.1} parent=1 // loop_pre_header
      _
    $region3: #{tpu_custom_call.1} parent=1 // loop_header
      %s16 = sphi 0, %s20
      %p17 = scmp.ge.s32.totalorder %s16, 4
      %s26 = sphi 0, %s28
      %s29 = sphi 0, %s26
      %s30 = sphi 0, %s29
      %s46 = sphi 0, %s30
      %s50 = sphi 0, %s50
      %s52 = sphi 0, %s50
      %s53 = sphi 0, %s52
      %s67 = sphi 0, %s53
      %s71 = sphi 0, %s71
      %s73 = sphi 0, %s71
      %s74 = sphi 0, %s73
      %s88 = sphi 0, %s74
      %s94 = sphi 0, %s96
      %s97 = sphi 0, %s94
      %s98 = sphi 0, %s97
      %s114 = sphi 0, %s98
    $region4: #{tpu_custom_call.1} parent=1 // loop_header_branch
      %19 = sbr.rel (%p17) target = $region8
    $region5: #{tpu_custom_call.1} parent=1 // loop_body
      %s21 = ssub.s32 %s16, 1
      %s22 = ssub.s32 %s16, 2
      %s23 = sadd.s32 %s16, 1
      %s24 = ssub.s32 %s16, %s23
      %p25 = scmp.eq.s32.totalorder %s24, 0
      %s27 = sadd.s32 %s26, 1
      %s28 = scalar_select %p25, %s26, %s27
      %p31 = pneg %p25
      %p32 = scmp.eq.s32.totalorder %s16, 1
      %p33 = por %p31, %p32
      %p34 = scmp.ne.s32.totalorder %s26, %s29
      %p35 = scmp.eq.s32.totalorder %s16, 0
      %p36 = por %p34, %p35
      %p37 = scmp.ne.s32.totalorder %s26, %s29
      %p38 = scmp.eq.s32.totalorder %s21, 1
      %p39 = por %p37, %p38
      %p40 = scmp.ne.s32.totalorder %s29, %s30
      %p41 = scmp.eq.s32.totalorder %s21, 0
      %p42 = por %p40, %p41
      %p43 = scmp.ne.s32.totalorder %s29, %s30
      %p44 = scmp.eq.s32.totalorder %s22, 1
      %p45 = por %p43, %p44
      %p47 = scmp.ne.s32.totalorder %s30, %s46
      %p48 = scmp.eq.s32.totalorder %s22, 0
      %p49 = por %p47, %p48
      %s51 = sadd.s32 %s50, 1
      %p54 = scmp.eq.s32.totalorder %s16, 1
      %p55 = scmp.ne.s32.totalorder %s50, %s52
      %p56 = scmp.eq.s32.totalorder %s16, 0
      %p57 = por %p55, %p56
      %p58 = scmp.ne.s32.totalorder %s50, %s52
      %p59 = scmp.eq.s32.totalorder %s21, 1
      %p60 = por %p58, %p59
      %p61 = scmp.ne.s32.totalorder %s52, %s53
      %p62 = scmp.eq.s32.totalorder %s21, 0
      %p63 = por %p61, %p62
      %p64 = scmp.ne.s32.totalorder %s52, %s53
      %p65 = scmp.eq.s32.totalorder %s22, 1
      %p66 = por %p64, %p65
      %p68 = scmp.ne.s32.totalorder %s53, %s67
      %p69 = scmp.eq.s32.totalorder %s22, 0
      %p70 = por %p68, %p69
      %s72 = sadd.s32 %s71, 1
      %p75 = scmp.eq.s32.totalorder %s16, 1
      %p76 = scmp.ne.s32.totalorder %s71, %s73
      %p77 = scmp.eq.s32.totalorder %s16, 0
      %p78 = por %p76, %p77
      %p79 = scmp.ne.s32.totalorder %s71, %s73
      %p80 = scmp.eq.s32.totalorder %s21, 1
      %p81 = por %p79, %p80
      %p82 = scmp.ne.s32.totalorder %s73, %s74
      %p83 = scmp.eq.s32.totalorder %s21, 0
      %p84 = por %p82, %p83
      %p85 = scmp.ne.s32.totalorder %s73, %s74
      %p86 = scmp.eq.s32.totalorder %s22, 1
      %p87 = por %p85, %p86
      %p89 = scmp.ne.s32.totalorder %s74, %s88
      %p90 = scmp.eq.s32.totalorder %s22, 0
      %p91 = por %p89, %p90
      %s92 = ssub.s32 %s16, %s23
      %p93 = scmp.eq.s32.totalorder %s92, 0
      %s95 = sadd.s32 %s94, 1
      %s96 = scalar_select %p93, %s94, %s95
      %p99 = pneg %p93
      %p100 = scmp.eq.s32.totalorder %s16, 1
      %p101 = por %p99, %p100
      %p102 = scmp.ne.s32.totalorder %s94, %s97
      %p103 = scmp.eq.s32.totalorder %s16, 0
      %p104 = por %p102, %p103
      %p105 = scmp.ne.s32.totalorder %s94, %s97
      %p106 = scmp.eq.s32.totalorder %s21, 1
      %p107 = por %p105, %p106
      %p108 = scmp.ne.s32.totalorder %s97, %s98
      %p109 = scmp.eq.s32.totalorder %s21, 0
      %p110 = por %p108, %p109
      %p111 = scmp.ne.s32.totalorder %s97, %s98
      %p112 = scmp.eq.s32.totalorder %s22, 1
      %p113 = por %p111, %p112
      %p115 = scmp.ne.s32.totalorder %s98, %s114
      %p116 = scmp.eq.s32.totalorder %s22, 0
      %p117 = por %p115, %p116
      %p118 = scmp.le.s32.totalorder 1, %s16
      %p119 = scmp.lt.s32.totalorder %s16, 3
      %p120 = pnand %p118, %p119
      %p121 = pneg %p120
      // Predicated region
      $region9: #{tpu_custom_call.1} parent=5 // pred_check
        _
      $region10: #{tpu_custom_call.1} parent=5 // pred_check_branch
        %123 = sbr.rel (%p120) target = $region12
      $region11: #{tpu_custom_call.1} parent=5 // pred_region
        %s124 = ssub.s32 %s16, 1
        // Predicated region
        $region13: #{tpu_custom_call.1} parent=11 // pred_check
          %p125 = pneg %p63
        $region14: #{tpu_custom_call.1} parent=11 // pred_check_branch
          %127 = sbr.rel (%p125) target = $region16
        $region15: #{tpu_custom_call.1} parent=11 // pred_region
          %s129 = ssub.s32 512, 512
          %130 = vsyncadd [#allocation6], %s129
          %s131 = sshll.u32 [#allocation5], 4
          %s132 = int_to_ptr.vmem [resolvable:$true] %s131
          %137 = dma.hbm_to_vmem [thread:$0]  %s1, 512, %s132, [#allocation6], 128, 128, 8
        $region16: #{tpu_custom_call.1} parent=11 // pred_fallthru
          _
        // Predicated region
        $region17: #{tpu_custom_call.1} parent=11 // pred_check
          %p138 = pneg %p84
        $region18: #{tpu_custom_call.1} parent=11 // pred_check_branch
          %140 = sbr.rel (%p138) target = $region20
        $region19: #{tpu_custom_call.1} parent=11 // pred_region
          _
        $region20: #{tpu_custom_call.1} parent=11 // pred_fallthru
          _
      $region12: #{tpu_custom_call.1} parent=5 // pred_fallthru
        _
      %p141 = scmp.lt.s32.totalorder %s16, 2
      // Predicated region
      $region21: #{tpu_custom_call.1} parent=5 // pred_check
        %p142 = pneg %p141
      $region22: #{tpu_custom_call.1} parent=5 // pred_check_branch
        %144 = sbr.rel (%p142) target = $region24
      $region23: #{tpu_custom_call.1} parent=5 // pred_region
        // Predicated region
        $region25: #{tpu_custom_call.1} parent=23 // pred_check
          %p145 = pneg %p36
        $region26: #{tpu_custom_call.1} parent=23 // pred_check_branch
          %147 = sbr.rel (%p145) target = $region28
        $region27: #{tpu_custom_call.1} parent=23 // pred_region
          %s148 = sand.u32 %s26, 1
          %s149 = scalar_lea.sflag [#allocation3], %s148
          %s150 = sand.u32 %s26, 1
          %s151 = smul.addr %s150, 8
          %s152 = scalar_lea.vmem [#allocation2], %s151
          %s154 = ssub.s32 128, 128
          %155 = vsyncadd %s149, %s154
          %s156 = smul.addr %s16, 128
          %s157 = scalar_lea.hbm %s0, %s156
          %s159 = sshll.u32 %s152, 4
          %s160 = int_to_ptr.vmem [resolvable:$true] %s159
          %162 = dma.hbm_to_vmem [thread:$0]  %s157, 128, %s160, %s149
        $region28: #{tpu_custom_call.1} parent=23 // pred_fallthru
          _
      $region24: #{tpu_custom_call.1} parent=5 // pred_fallthru
        _
      %p163 = scmp.le.s32.totalorder 1, %s16
      %p164 = scmp.lt.s32.totalorder %s16, 3
      %p165 = pnand %p163, %p164
      %p166 = pneg %p165
      // Predicated region
      $region29: #{tpu_custom_call.1} parent=5 // pred_check
        _
      $region30: #{tpu_custom_call.1} parent=5 // pred_check_branch
        %168 = sbr.rel (%p165) target = $region32
      $region31: #{tpu_custom_call.1} parent=5 // pred_region
        %s169 = ssub.s32 %s16, 1
        %s170 = sand.u32 %s29, 1
        %s171 = scalar_lea.sflag [#allocation3], %s170
        %s172 = sand.u32 %s29, 1
        %s173 = smul.addr %s172, 8
        %s174 = scalar_lea.vmem [#allocation2], %s173
        // Predicated region
        $region33: #{tpu_custom_call.1} parent=31 // pred_check
          %p175 = pneg %p42
        $region34: #{tpu_custom_call.1} parent=31 // pred_check_branch
          %177 = sbr.rel (%p175) target = $region36
        $region35: #{tpu_custom_call.1} parent=31 // pred_region
          %178 = dma.done %s171, 128
        $region36: #{tpu_custom_call.1} parent=31 // pred_fallthru
          _
        // Predicated region
        $region37: #{tpu_custom_call.1} parent=31 // pred_check
          %p179 = pneg %p63
        $region38: #{tpu_custom_call.1} parent=31 // pred_check_branch
          %181 = sbr.rel (%p179) target = $region40
        $region39: #{tpu_custom_call.1} parent=31 // pred_region
          %182 = dma.done [#allocation6], 512
        $region40: #{tpu_custom_call.1} parent=31 // pred_fallthru
          _
        %s183 = sand.u32 %s29, 1
        %s184 = scalar_lea.sflag [#allocation3], %s183
        %s185 = sand.u32 %s29, 1
        %s186 = smul.addr %s185, 8
        %s187 = scalar_lea.vmem [#allocation2], %s186
        %p188 = pneg %p42
        %p189 = pneg %p39
        %p190 = pneg %p63
        %p191 = pneg %p60
        %p192 = pneg %p84
        %p193 = pneg %p81
        %p194 = pneg %p110
        %p195 = pneg %p107
        %s196 = sand.u32 %s97, 1
        %s197 = scalar_lea.sflag [#allocation4], %s196
        %s198 = sand.u32 %s97, 1
        %s199 = smul.addr %s198, 8
        %s200 = scalar_lea.vmem [#allocation7], %s199
        %v201 = vld [vmem:[%s174] sm:$0xff]
        %v202 = vld [vmem:[#allocation5] sm:$0xff]
        %v203 = vld [vmem:[#allocation5 + $0x8] sm:$0xff]
        %v204 = vld [vmem:[#allocation5 + $0x10] sm:$0xff]
        %v205 = vld [vmem:[#allocation5 + $0x18] sm:$0xff]
        %v206 = vld [vmem:[%s2] sm:$0x1]
        %v208 = vlaneseq
        %v209 = vshrl.u32 %v208, 7
        %v210 = vsub.s32 0, %v209
        %v211 = vrot.slane %v206, %v210
        %vm213 = vcmask 261120
        %v215 = vsel %vm213, %v201, 0
        %217 = vmatprep.subr.mxu0 0.0
        %v218 = vand.u32 %v202, 4294901760
        %219 = vmatpush1.msra.mxu0 %v218
        %220 = vmatprep.subr.mxu0 0.0
        %v221 = vand.u32 %v203, 4294901760
        %222 = vmatpush1.msra.mxu0 %v221
        %223 = vmatprep.subr.mxu0 0.0
        %v224 = vand.u32 %v204, 4294901760
        %225 = vmatpush1.msra.mxu0 %v224
        %226 = vmatprep.subr.mxu0 0.0
        %v227 = vand.u32 %v205, 4294901760
        %228 = vmatpush1.msra.mxu0 %v227
        %229 = vmatprep.subr.mxu0 0.0
        %230 = vmatpush1.msra.mxu0 0.0
        %231 = vmatprep.subr.mxu0 0.0
        %232 = vmatpush1.msra.mxu0 0.0
        %233 = vmatprep.subr.mxu0 0.0
        %234 = vmatpush1.msra.mxu0 0.0
        %235 = vmatprep.subr.mxu0 0.0
        %236 = vmatpush1.msra.mxu0 0.0
        %237 = vmatprep.subr.mxu0 0.0
        %238 = vmatpush1.msra.mxu0 0.0
        %239 = vmatprep.subr.mxu0 0.0
        %240 = vmatpush1.msra.mxu0 0.0
        %241 = vmatprep.subr.mxu0 0.0
        %242 = vmatpush1.msra.mxu0 0.0
        %243 = vmatprep.subr.mxu0 0.0
        %244 = vmatpush1.msra.mxu0 0.0
        %245 = vmatprep.subr.mxu0 0.0
        %246 = vmatpush1.msra.mxu0 0.0
        %247 = vmatprep.subr.mxu0 0.0
        %248 = vmatpush1.msra.mxu0 0.0
        %249 = vmatprep.subr.mxu0 0.0
        %250 = vmatpush1.msra.mxu0 0.0
        %251 = vmatprep.subr.mxu0 0.0
        %252 = vmatpush1.msra.mxu0 0.0
        %253 = vmatprep.subr.mxu0 0.0
        %254 = vmatpush1.msra.mxu0 0.0
        %255 = vmatprep.subr.mxu0 0.0
        %256 = vmatpush1.msra.mxu0 0.0
        %257 = vmatprep.subr.mxu0 0.0
        %258 = vmatpush1.msra.mxu0 0.0
        %259 = vmatprep.subr.mxu0 0.0
        %260 = vmatpush1.msra.mxu0 0.0
        %261 = vmatprep.subr.mxu0 0.0
        %262 = vmatpush1.msra.mxu0 0.0
        %263 = vmatprep.subr.mxu0 0.0
        %264 = vmatpush1.msra.mxu0 0.0
        %265 = vmatprep.subr.mxu0 0.0
        %266 = vmatpush1.msra.mxu0 0.0
        %267 = vmatprep.subr.mxu0 0.0
        %268 = vmatpush1.msra.mxu0 0.0
        %269 = vmatprep.subr.mxu0 0.0
        %270 = vmatpush1.msra.mxu0 0.0
        %271 = vmatprep.subr.mxu0 0.0
        %272 = vmatpush1.msra.mxu0 0.0
        %273 = vmatprep.subr.mxu0 0.0
        %274 = vmatpush1.msra.mxu0 0.0
        %275 = vmatprep.subr.mxu0 0.0
        %276 = vmatpush1.msra.mxu0 0.0
        %277 = vmatprep.subr.mxu0 0.0
        %278 = vmatpush1.msra.mxu0 0.0
        %279 = vmatprep.subr.mxu0 0.0
        %280 = vmatpush1.msra.mxu0 0.0
        %281 = vmatprep.subr.mxu0 0.0
        %282 = vmatpush1.msra.mxu0 0.0
        %283 = vmatprep.subr.mxu0 0.0
        %284 = vmatpush1.msra.mxu0 0.0
        %285 = vmatprep.mubr.f32.mxu0 0.0
        %v286 = vand.u32 %v215, 4294901760
        %v287 = vsub.f32 %v215, %v286
        %v288 = vand.u32 %v287, 4294901760
        %v289 = vsub.f32 %v287, %v288
        %v290 = vand.u32 %v289, 4294901760
        %291 = vmatmul.mubr.f32.gmra.mrb[0].mxu0 %v290
        %v292 = vpop.f32.mrb[0].mxu0
        %v293 = vadd.f32 %v211, %v292
        %v294 = vpop.f32.mrb[0].mxu0
        %295 = vdwg.mxu0
        %296 = vmatprep.subr.mxu0 0.0
        %v297 = vand.u32 %v202, 4294901760
        %v298 = vsub.f32 %v202, %v297
        %v299 = vand.u32 %v298, 4294901760
        %v300 = vsub.f32 %v298, %v299
        %v301 = vand.u32 %v300, 4294901760
        %302 = vmatpush1.msra.mxu0 %v301
        %303 = vmatprep.subr.mxu0 0.0
        %v304 = vand.u32 %v203, 4294901760
        %v305 = vsub.f32 %v203, %v304
        %v306 = vand.u32 %v305, 4294901760
        %v307 = vsub.f32 %v305, %v306
        %v308 = vand.u32 %v307, 4294901760
        %309 = vmatpush1.msra.mxu0 %v308
        %310 = vmatprep.subr.mxu0 0.0
        %v311 = vand.u32 %v204, 4294901760
        %v312 = vsub.f32 %v204, %v311
        %v313 = vand.u32 %v312, 4294901760
        %v314 = vsub.f32 %v312, %v313
        %v315 = vand.u32 %v314, 4294901760
        %316 = vmatpush1.msra.mxu0 %v315
        %317 = vmatprep.subr.mxu0 0.0
        %v318 = vand.u32 %v205, 4294901760
        %v319 = vsub.f32 %v205, %v318
        %v320 = vand.u32 %v319, 4294901760
        %v321 = vsub.f32 %v319, %v320
        %v322 = vand.u32 %v321, 4294901760
        %323 = vmatpush1.msra.mxu0 %v322
        %324 = vmatprep.subr.mxu0 0.0
        %325 = vmatpush1.msra.mxu0 0.0
        %326 = vmatprep.subr.mxu0 0.0
        %327 = vmatpush1.msra.mxu0 0.0
        %328 = vmatprep.subr.mxu0 0.0
        %329 = vmatpush1.msra.mxu0 0.0
        %330 = vmatprep.subr.mxu0 0.0
        %331 = vmatpush1.msra.mxu0 0.0
        %332 = vmatprep.subr.mxu0 0.0
        %333 = vmatpush1.msra.mxu0 0.0
        %334 = vmatprep.subr.mxu0 0.0
        %335 = vmatpush1.msra.mxu0 0.0
        %336 = vmatprep.subr.mxu0 0.0
        %337 = vmatpush1.msra.mxu0 0.0
        %338 = vmatprep.subr.mxu0 0.0
        %339 = vmatpush1.msra.mxu0 0.0
        %340 = vmatprep.subr.mxu0 0.0
        %341 = vmatpush1.msra.mxu0 0.0
        %342 = vmatprep.subr.mxu0 0.0
        %343 = vmatpush1.msra.mxu0 0.0
        %344 = vmatprep.subr.mxu0 0.0
        %345 = vmatpush1.msra.mxu0 0.0
        %346 = vmatprep.subr.mxu0 0.0
        %347 = vmatpush1.msra.mxu0 0.0
        %348 = vmatprep.subr.mxu0 0.0
        %349 = vmatpush1.msra.mxu0 0.0
        %350 = vmatprep.subr.mxu0 0.0
        %351 = vmatpush1.msra.mxu0 0.0
        %352 = vmatprep.subr.mxu0 0.0
        %353 = vmatpush1.msra.mxu0 0.0
        %354 = vmatprep.subr.mxu0 0.0
        %355 = vmatpush1.msra.mxu0 0.0
        %356 = vmatprep.subr.mxu0 0.0
        %357 = vmatpush1.msra.mxu0 0.0
        %358 = vmatprep.subr.mxu0 0.0
        %359 = vmatpush1.msra.mxu0 0.0
        %360 = vmatprep.subr.mxu0 0.0
        %361 = vmatpush1.msra.mxu0 0.0
        %362 = vmatprep.subr.mxu0 0.0
        %363 = vmatpush1.msra.mxu0 0.0
        %364 = vmatprep.subr.mxu0 0.0
        %365 = vmatpush1.msra.mxu0 0.0
        %366 = vmatprep.subr.mxu0 0.0
        %367 = vmatpush1.msra.mxu0 0.0
        %368 = vmatprep.subr.mxu0 0.0
        %369 = vmatpush1.msra.mxu0 0.0
        %370 = vmatprep.subr.mxu0 0.0
        %371 = vmatpush1.msra.mxu0 0.0
        %372 = vmatprep.subr.mxu0 0.0
        %373 = vmatpush1.msra.mxu0 0.0
        %374 = vmatprep.subr.mxu0 0.0
        %375 = vmatpush1.msra.mxu0 0.0
        %376 = vmatprep.subr.mxu0 0.0
        %377 = vmatpush1.msra.mxu0 0.0
        %378 = vmatprep.subr.mxu0 0.0
        %379 = vmatpush1.msra.mxu0 0.0
        %380 = vmatprep.mubr.f32.mxu0 0.0
        %v381 = vand.u32 %v215, 4294901760
        %382 = vmatmul.mubr.f32.gmra.mrb[0].mxu0 %v381
        %v383 = vpop.f32.mrb[0].mxu0
        %v384 = vadd.f32 %v293, %v383
        %v385 = vpop.f32.mrb[0].mxu0
        %386 = vdwg.mxu0
        %387 = vmatprep.subr.mxu0 0.0
        %v388 = vand.u32 %v202, 4294901760
        %v389 = vsub.f32 %v202, %v388
        %390 = vmatpush1.msra.mxu0 %v389
        %391 = vmatprep.subr.mxu0 0.0
        %v392 = vand.u32 %v203, 4294901760
        %v393 = vsub.f32 %v203, %v392
        %394 = vmatpush1.msra.mxu0 %v393
        %395 = vmatprep.subr.mxu0 0.0
        %v396 = vand.u32 %v204, 4294901760
        %v397 = vsub.f32 %v204, %v396
        %398 = vmatpush1.msra.mxu0 %v397
        %399 = vmatprep.subr.mxu0 0.0
        %v400 = vand.u32 %v205, 4294901760
        %v401 = vsub.f32 %v205, %v400
        %402 = vmatpush1.msra.mxu0 %v401
        %403 = vmatprep.subr.mxu0 0.0
        %404 = vmatpush1.msra.mxu0 0.0
        %405 = vmatprep.subr.mxu0 0.0
        %406 = vmatpush1.msra.mxu0 0.0
        %407 = vmatprep.subr.mxu0 0.0
        %408 = vmatpush1.msra.mxu0 0.0
        %409 = vmatprep.subr.mxu0 0.0
        %410 = vmatpush1.msra.mxu0 0.0
        %411 = vmatprep.subr.mxu0 0.0
        %412 = vmatpush1.msra.mxu0 0.0
        %413 = vmatprep.subr.mxu0 0.0
        %414 = vmatpush1.msra.mxu0 0.0
        %415 = vmatprep.subr.mxu0 0.0
        %416 = vmatpush1.msra.mxu0 0.0
        %417 = vmatprep.subr.mxu0 0.0
        %418 = vmatpush1.msra.mxu0 0.0
        %419 = vmatprep.subr.mxu0 0.0
        %420 = vmatpush1.msra.mxu0 0.0
        %421 = vmatprep.subr.mxu0 0.0
        %422 = vmatpush1.msra.mxu0 0.0
        %423 = vmatprep.subr.mxu0 0.0
        %424 = vmatpush1.msra.mxu0 0.0
        %425 = vmatprep.subr.mxu0 0.0
        %426 = vmatpush1.msra.mxu0 0.0
        %427 = vmatprep.subr.mxu0 0.0
        %428 = vmatpush1.msra.mxu0 0.0
        %429 = vmatprep.subr.mxu0 0.0
        %430 = vmatpush1.msra.mxu0 0.0
        %431 = vmatprep.subr.mxu0 0.0
        %432 = vmatpush1.msra.mxu0 0.0
        %433 = vmatprep.subr.mxu0 0.0
        %434 = vmatpush1.msra.mxu0 0.0
        %435 = vmatprep.subr.mxu0 0.0
        %436 = vmatpush1.msra.mxu0 0.0
        %437 = vmatprep.subr.mxu0 0.0
        %438 = vmatpush1.msra.mxu0 0.0
        %439 = vmatprep.subr.mxu0 0.0
        %440 = vmatpush1.msra.mxu0 0.0
        %441 = vmatprep.subr.mxu0 0.0
        %442 = vmatpush1.msra.mxu0 0.0
        %443 = vmatprep.subr.mxu0 0.0
        %444 = vmatpush1.msra.mxu0 0.0
        %445 = vmatprep.subr.mxu0 0.0
        %446 = vmatpush1.msra.mxu0 0.0
        %447 = vmatprep.subr.mxu0 0.0
        %448 = vmatpush1.msra.mxu0 0.0
        %449 = vmatprep.subr.mxu0 0.0
        %450 = vmatpush1.msra.mxu0 0.0
        %451 = vmatprep.subr.mxu0 0.0
        %452 = vmatpush1.msra.mxu0 0.0
        %453 = vmatprep.subr.mxu0 0.0
        %454 = vmatpush1.msra.mxu0 0.0
        %455 = vmatprep.subr.mxu0 0.0
        %456 = vmatpush1.msra.mxu0 0.0
        %457 = vmatprep.subr.mxu0 0.0
        %458 = vmatpush1.msra.mxu0 0.0
        %459 = vmatprep.mubr.f32.mxu0 0.0
        %v460 = vand.u32 %v215, 4294901760
        %v461 = vsub.f32 %v215, %v460
        %462 = vmatmul.mubr.f32.gmra.mrb[0].mxu0 %v461
        %v463 = vpop.f32.mrb[0].mxu0
        %v464 = vadd.f32 %v384, %v463
        %v465 = vpop.f32.mrb[0].mxu0
        %466 = vdwg.mxu0
        %467 = vmatprep.subr.mxu0 0.0
        %v468 = vand.u32 %v202, 4294901760
        %469 = vmatpush1.msra.mxu0 %v468
        %470 = vmatprep.subr.mxu0 0.0
        %v471 = vand.u32 %v203, 4294901760
        %472 = vmatpush1.msra.mxu0 %v471
        %473 = vmatprep.subr.mxu0 0.0
        %v474 = vand.u32 %v204, 4294901760
        %475 = vmatpush1.msra.mxu0 %v474
        %476 = vmatprep.subr.mxu0 0.0
        %v477 = vand.u32 %v205, 4294901760
        %478 = vmatpush1.msra.mxu0 %v477
        %479 = vmatprep.subr.mxu0 0.0
        %480 = vmatpush1.msra.mxu0 0.0
        %481 = vmatprep.subr.mxu0 0.0
        %482 = vmatpush1.msra.mxu0 0.0
        %483 = vmatprep.subr.mxu0 0.0
        %484 = vmatpush1.msra.mxu0 0.0
        %485 = vmatprep.subr.mxu0 0.0
        %486 = vmatpush1.msra.mxu0 0.0
        %487 = vmatprep.subr.mxu0 0.0
        %488 = vmatpush1.msra.mxu0 0.0
        %489 = vmatprep.subr.mxu0 0.0
        %490 = vmatpush1.msra.mxu0 0.0
        %491 = vmatprep.subr.mxu0 0.0
        %492 = vmatpush1.msra.mxu0 0.0
        %493 = vmatprep.subr.mxu0 0.0
        %494 = vmatpush1.msra.mxu0 0.0
        %495 = vmatprep.subr.mxu0 0.0
        %496 = vmatpush1.msra.mxu0 0.0
        %497 = vmatprep.subr.mxu0 0.0
        %498 = vmatpush1.msra.mxu0 0.0
        %499 = vmatprep.subr.mxu0 0.0
        %500 = vmatpush1.msra.mxu0 0.0
        %501 = vmatprep.subr.mxu0 0.0
        %502 = vmatpush1.msra.mxu0 0.0
        %503 = vmatprep.subr.mxu0 0.0
        %504 = vmatpush1.msra.mxu0 0.0
        %505 = vmatprep.subr.mxu0 0.0
        %506 = vmatpush1.msra.mxu0 0.0
        %507 = vmatprep.subr.mxu0 0.0
        %508 = vmatpush1.msra.mxu0 0.0
        %509 = vmatprep.subr.mxu0 0.0
        %510 = vmatpush1.msra.mxu0 0.0
        %511 = vmatprep.subr.mxu0 0.0
        %512 = vmatpush1.msra.mxu0 0.0
        %513 = vmatprep.subr.mxu0 0.0
        %514 = vmatpush1.msra.mxu0 0.0
        %515 = vmatprep.subr.mxu0 0.0
        %516 = vmatpush1.msra.mxu0 0.0
        %517 = vmatprep.subr.mxu0 0.0
        %518 = vmatpush1.msra.mxu0 0.0
        %519 = vmatprep.subr.mxu0 0.0
        %520 = vmatpush1.msra.mxu0 0.0
        %521 = vmatprep.subr.mxu0 0.0
        %522 = vmatpush1.msra.mxu0 0.0
        %523 = vmatprep.subr.mxu0 0.0
        %524 = vmatpush1.msra.mxu0 0.0
        %525 = vmatprep.subr.mxu0 0.0
        %526 = vmatpush1.msra.mxu0 0.0
        %527 = vmatprep.subr.mxu0 0.0
        %528 = vmatpush1.msra.mxu0 0.0
        %529 = vmatprep.subr.mxu0 0.0
        %530 = vmatpush1.msra.mxu0 0.0
        %531 = vmatprep.subr.mxu0 0.0
        %532 = vmatpush1.msra.mxu0 0.0
        %533 = vmatprep.subr.mxu0 0.0
        %534 = vmatpush1.msra.mxu0 0.0
        %535 = vmatprep.mubr.f32.mxu0 0.0
        %v536 = vand.u32 %v215, 4294901760
        %v537 = vsub.f32 %v215, %v536
        %v538 = vand.u32 %v537, 4294901760
        %539 = vmatmul.mubr.f32.gmra.mrb[0].mxu0 %v538
        %v540 = vpop.f32.mrb[0].mxu0
        %v541 = vadd.f32 %v464, %v540
        %v542 = vpop.f32.mrb[0].mxu0
        %543 = vdwg.mxu0
        %544 = vmatprep.subr.mxu0 0.0
        %v545 = vand.u32 %v202, 4294901760
        %v546 = vsub.f32 %v202, %v545
        %v547 = vand.u32 %v546, 4294901760
        %548 = vmatpush1.msra.mxu0 %v547
        %549 = vmatprep.subr.mxu0 0.0
        %v550 = vand.u32 %v203, 4294901760
        %v551 = vsub.f32 %v203, %v550
        %v552 = vand.u32 %v551, 4294901760
        %553 = vmatpush1.msra.mxu0 %v552
        %554 = vmatprep.subr.mxu0 0.0
        %v555 = vand.u32 %v204, 4294901760
        %v556 = vsub.f32 %v204, %v555
        %v557 = vand.u32 %v556, 4294901760
        %558 = vmatpush1.msra.mxu0 %v557
        %559 = vmatprep.subr.mxu0 0.0
        %v560 = vand.u32 %v205, 4294901760
        %v561 = vsub.f32 %v205, %v560
        %v562 = vand.u32 %v561, 4294901760
        %563 = vmatpush1.msra.mxu0 %v562
        %564 = vmatprep.subr.mxu0 0.0
        %565 = vmatpush1.msra.mxu0 0.0
        %566 = vmatprep.subr.mxu0 0.0
        %567 = vmatpush1.msra.mxu0 0.0
        %568 = vmatprep.subr.mxu0 0.0
        %569 = vmatpush1.msra.mxu0 0.0
        %570 = vmatprep.subr.mxu0 0.0
        %571 = vmatpush1.msra.mxu0 0.0
        %572 = vmatprep.subr.mxu0 0.0
        %573 = vmatpush1.msra.mxu0 0.0
        %574 = vmatprep.subr.mxu0 0.0
        %575 = vmatpush1.msra.mxu0 0.0
        %576 = vmatprep.subr.mxu0 0.0
        %577 = vmatpush1.msra.mxu0 0.0
        %578 = vmatprep.subr.mxu0 0.0
        %579 = vmatpush1.msra.mxu0 0.0
        %580 = vmatprep.subr.mxu0 0.0
        %581 = vmatpush1.msra.mxu0 0.0
        %582 = vmatprep.subr.mxu0 0.0
        %583 = vmatpush1.msra.mxu0 0.0
        %584 = vmatprep.subr.mxu0 0.0
        %585 = vmatpush1.msra.mxu0 0.0
        %586 = vmatprep.subr.mxu0 0.0
        %587 = vmatpush1.msra.mxu0 0.0
        %588 = vmatprep.subr.mxu0 0.0
        %589 = vmatpush1.msra.mxu0 0.0
        %590 = vmatprep.subr.mxu0 0.0
        %591 = vmatpush1.msra.mxu0 0.0
        %592 = vmatprep.subr.mxu0 0.0
        %593 = vmatpush1.msra.mxu0 0.0
        %594 = vmatprep.subr.mxu0 0.0
        %595 = vmatpush1.msra.mxu0 0.0
        %596 = vmatprep.subr.mxu0 0.0
        %597 = vmatpush1.msra.mxu0 0.0
        %598 = vmatprep.subr.mxu0 0.0
        %599 = vmatpush1.msra.mxu0 0.0
        %600 = vmatprep.subr.mxu0 0.0
        %601 = vmatpush1.msra.mxu0 0.0
        %602 = vmatprep.subr.mxu0 0.0
        %603 = vmatpush1.msra.mxu0 0.0
        %604 = vmatprep.subr.mxu0 0.0
        %605 = vmatpush1.msra.mxu0 0.0
        %606 = vmatprep.subr.mxu0 0.0
        %607 = vmatpush1.msra.mxu0 0.0
        %608 = vmatprep.subr.mxu0 0.0
        %609 = vmatpush1.msra.mxu0 0.0
        %610 = vmatprep.subr.mxu0 0.0
        %611 = vmatpush1.msra.mxu0 0.0
        %612 = vmatprep.subr.mxu0 0.0
        %613 = vmatpush1.msra.mxu0 0.0
        %614 = vmatprep.subr.mxu0 0.0
        %615 = vmatpush1.msra.mxu0 0.0
        %616 = vmatprep.subr.mxu0 0.0
        %617 = vmatpush1.msra.mxu0 0.0
        %618 = vmatprep.subr.mxu0 0.0
        %619 = vmatpush1.msra.mxu0 0.0
        %620 = vmatprep.mubr.f32.mxu0 0.0
        %v621 = vand.u32 %v215, 4294901760
        %622 = vmatmul.mubr.f32.gmra.mrb[0].mxu0 %v621
        %v623 = vpop.f32.mrb[0].mxu0
        %v624 = vadd.f32 %v541, %v623
        %v625 = vpop.f32.mrb[0].mxu0
        %626 = vdwg.mxu0
        %627 = vmatprep.subr.mxu0 0.0
        %v628 = vand.u32 %v202, 4294901760
        %629 = vmatpush1.msra.mxu0 %v628
        %630 = vmatprep.subr.mxu0 0.0
        %v631 = vand.u32 %v203, 4294901760
        %632 = vmatpush1.msra.mxu0 %v631
        %633 = vmatprep.subr.mxu0 0.0
        %v634 = vand.u32 %v204, 4294901760
        %635 = vmatpush1.msra.mxu0 %v634
        %636 = vmatprep.subr.mxu0 0.0
        %v637 = vand.u32 %v205, 4294901760
        %638 = vmatpush1.msra.mxu0 %v637
        %639 = vmatprep.subr.mxu0 0.0
        %640 = vmatpush1.msra.mxu0 0.0
        %641 = vmatprep.subr.mxu0 0.0
        %642 = vmatpush1.msra.mxu0 0.0
        %643 = vmatprep.subr.mxu0 0.0
        %644 = vmatpush1.msra.mxu0 0.0
        %645 = vmatprep.subr.mxu0 0.0
        %646 = vmatpush1.msra.mxu0 0.0
        %647 = vmatprep.subr.mxu0 0.0
        %648 = vmatpush1.msra.mxu0 0.0
        %649 = vmatprep.subr.mxu0 0.0
        %650 = vmatpush1.msra.mxu0 0.0
        %651 = vmatprep.subr.mxu0 0.0
        %652 = vmatpush1.msra.mxu0 0.0
        %653 = vmatprep.subr.mxu0 0.0
        %654 = vmatpush1.msra.mxu0 0.0
        %655 = vmatprep.subr.mxu0 0.0
        %656 = vmatpush1.msra.mxu0 0.0
        %657 = vmatprep.subr.mxu0 0.0
        %658 = vmatpush1.msra.mxu0 0.0
        %659 = vmatprep.subr.mxu0 0.0
        %660 = vmatpush1.msra.mxu0 0.0
        %661 = vmatprep.subr.mxu0 0.0
        %662 = vmatpush1.msra.mxu0 0.0
        %663 = vmatprep.subr.mxu0 0.0
        %664 = vmatpush1.msra.mxu0 0.0
        %665 = vmatprep.subr.mxu0 0.0
        %666 = vmatpush1.msra.mxu0 0.0
        %667 = vmatprep.subr.mxu0 0.0
        %668 = vmatpush1.msra.mxu0 0.0
        %669 = vmatprep.subr.mxu0 0.0
        %670 = vmatpush1.msra.mxu0 0.0
        %671 = vmatprep.subr.mxu0 0.0
        %672 = vmatpush1.msra.mxu0 0.0
        %673 = vmatprep.subr.mxu0 0.0
        %674 = vmatpush1.msra.mxu0 0.0
        %675 = vmatprep.subr.mxu0 0.0
        %676 = vmatpush1.msra.mxu0 0.0
        %677 = vmatprep.subr.mxu0 0.0
        %678 = vmatpush1.msra.mxu0 0.0
        %679 = vmatprep.subr.mxu0 0.0
        %680 = vmatpush1.msra.mxu0 0.0
        %681 = vmatprep.subr.mxu0 0.0
        %682 = vmatpush1.msra.mxu0 0.0
        %683 = vmatprep.subr.mxu0 0.0
        %684 = vmatpush1.msra.mxu0 0.0
        %685 = vmatprep.subr.mxu0 0.0
        %686 = vmatpush1.msra.mxu0 0.0
        %687 = vmatprep.subr.mxu0 0.0
        %688 = vmatpush1.msra.mxu0 0.0
        %689 = vmatprep.subr.mxu0 0.0
        %690 = vmatpush1.msra.mxu0 0.0
        %691 = vmatprep.subr.mxu0 0.0
        %692 = vmatpush1.msra.mxu0 0.0
        %693 = vmatprep.subr.mxu0 0.0
        %694 = vmatpush1.msra.mxu0 0.0
        %695 = vmatprep.mubr.f32.mxu0 0.0
        %v696 = vand.u32 %v215, 4294901760
        %697 = vmatmul.mubr.f32.gmra.mrb[0].mxu0 %v696
        %v698 = vpop.f32.mrb[0].mxu0
        %v699 = vadd.f32 %v624, %v698
        %v700 = vpop.f32.mrb[0].mxu0
        %701 = vdwg.mxu0
        %vm702 = vcmask 523264
        %703 = vst.msk [vmem:[%s200] sm:$0xff] %vm702, %v699
        %s704 = sand.u32 %s97, 1
        %s705 = scalar_lea.sflag [#allocation4], %s704
        %s706 = sand.u32 %s97, 1
        %s707 = smul.addr %s706, 8
        %s708 = scalar_lea.vmem [#allocation7], %s707
        // Predicated region
        $region41: #{tpu_custom_call.1} parent=31 // pred_check
          %p709 = pneg %p107
        $region42: #{tpu_custom_call.1} parent=31 // pred_check_branch
          %711 = sbr.rel (%p709) target = $region44
        $region43: #{tpu_custom_call.1} parent=31 // pred_region
          %s713 = ssub.s32 128, 128
          %714 = vsyncadd %s705, %s713
          %s715 = smul.addr %s21, 128
          %s716 = scalar_lea.hbm %s3, %s715
          %s718 = sshll.u32 %s708, 4
          %s719 = int_to_ptr.vmem [resolvable:$true] %s718
          %721 = dma.vmem_to_hbm [thread:$0]  %s719, 128, %s716, %s705
        $region44: #{tpu_custom_call.1} parent=31 // pred_fallthru
          _
      $region32: #{tpu_custom_call.1} parent=5 // pred_fallthru
        _
      %p722 = scmp.le.s32.totalorder 2, %s16
      // Predicated region
      $region45: #{tpu_custom_call.1} parent=5 // pred_check
        %p723 = pneg %p722
      $region46: #{tpu_custom_call.1} parent=5 // pred_check_branch
        %725 = sbr.rel (%p723) target = $region48
      $region47: #{tpu_custom_call.1} parent=5 // pred_region
        %s726 = ssub.s32 %s16, 2
        // Predicated region
        $region49: #{tpu_custom_call.1} parent=47 // pred_check
          %p727 = pneg %p113
        $region50: #{tpu_custom_call.1} parent=47 // pred_check_branch
          %729 = sbr.rel (%p727) target = $region52
        $region51: #{tpu_custom_call.1} parent=47 // pred_region
          %s730 = sand.u32 %s98, 1
          %s731 = scalar_lea.sflag [#allocation4], %s730
          %s732 = sand.u32 %s98, 1
          %s733 = smul.addr %s732, 8
          %s734 = scalar_lea.vmem [#allocation7], %s733
          %735 = dma.done %s731, 128
        $region52: #{tpu_custom_call.1} parent=47 // pred_fallthru
          _
      $region48: #{tpu_custom_call.1} parent=5 // pred_fallthru
        _
    $region6: #{tpu_custom_call.1} parent=1 // loop_footer
      %s20 = sadd.s32 1, %s16
    $region7: #{tpu_custom_call.1} parent=1 // loop_footer_branch
      %15 = sbr.rel target = $region3
    $region8: #{tpu_custom_call.1} parent=1 // loop_exit
      _
    %736 = vsyncpa [#allocation3], 1
    %s737 = scalar_lea.sflag [#allocation3], 1
    %738 = vsyncpa %s737, 1
    %739 = vsyncpa [#allocation6], 1
    %740 = vsyncpa [#allocation4], 1
    %s741 = scalar_lea.sflag [#allocation4], 1
    %742 = vsyncpa %s741, 1

</llo_original>
